<compile_context>
chip_gen: v5e
topology: v5e:2x2
jax: 0.10.0
libtpu: 0.0.40
codegen_flags: <defaults>
</compile_context>

<pallas_src>
import jax
import jax.numpy as jnp
from jax import lax
from jax.experimental import pallas as pl
from jax.experimental.pallas import tpu as pltpu


def mlp_kernel(x_ref, w1_ref, b1_ref, w2_ref, b2_ref, o_ref, acc_ref):
    """One (batch-tile i, k-tile) step of relu(x @ W1.T + b1) @ W2.T + b2."""
    k = pl.program_id(1)

    @pl.when(k == 0)
    def _init():
        acc_ref[...] = jnp.zeros_like(acc_ref)

    # First-layer partial product on the MXU (bf16 in, f32 accumulate).
    # W1 stays in PyTorch (out_features, in_features) layout: contract the
    # last dims of x and W1 directly -> no materialized transpose.
    acc_ref[...] += lax.dot_general(
        x_ref[...],
        w1_ref[...],
        dimension_numbers=(((1,), (1,)), ((), ())),
        preferred_element_type=jnp.float32,
    )

    # Epilogue once per batch tile (last K step): bias + ReLU + (D -> 1) proj.
    @pl.when(k == pl.num_programs(1) - 1)
    def _finalize():
        h = jnp.maximum(acc_ref[...] + b1_ref[...], 0.0)
        # N=1 second linear: VPU multiply + cross-lane sum (MXU stays free).
        out = jnp.sum(h * w2_ref[...], axis=-1, keepdims=True) + b2_ref[0, 0]
        o_ref[...] = out.astype(o_ref.dtype)


def _round_up(n, m):
    return ((n + m - 1) // m) * m


def _largest_aligned_divisor(dim, preferred, align):
    """Largest multiple-of-`align` divisor of `dim` that is <= preferred."""
    t = (preferred // align) * align
    while t >= align:
        if dim % t == 0:
            return t
        t -= align
    return None


def _plan(B, D):
    """Padded shapes, tile sizes and explicit VMEM budget for this chip."""
    try:
        vmem_bytes = int(pltpu.get_tpu_info().vmem_capacity_bytes)
    except Exception:
        vmem_bytes = 64 * 1024 * 1024            # conservative (v7x-sized)
    try:
        kind = jax.devices()[0].device_kind.lower()
    except Exception:
        kind = ""
    is_v5 = "v5" in kind
    is_v7 = ("v7" in kind) or vmem_bytes <= 64 * 1024 * 1024

    budget = int(vmem_bytes * 0.75)              # ~48 MiB v7x, ~96 MiB v5e/v6e
    tm_pref = 128 if is_v5 else 256              # v6e/v7x: fewer W1 re-streams
    tk_pref = 256 if is_v5 else 512

    wb = 2                                       # bf16 x / W1 bytes

    def footprint(tm, tk, d_pad):
        return (2 * d_pad * tk * wb              # W1 K-slab, double-buffered
                + 2 * tm * tk * wb               # x tile, double-buffered
                + tm * d_pad * 4                 # f32 accumulator scratch
                + 4 * d_pad * 4                  # b1 + w2 (1, D) blocks, 2 bufs
                + 2 * tm * 4)                    # (tm, 1) output tile

    # --- batch tiling: pad rather than ever falling back to tm == B ---
    b_pad = _round_up(B, 8)
    if b_pad <= tm_pref:
        tm = b_pad
    else:
        tm = _largest_aligned_divisor(b_pad, tm_pref, 8)
        if tm is None or tm < tm_pref // 2:      # awkward B: small pad instead
            tm = tm_pref
            b_pad = _round_up(b_pad, tm)
    if is_v7 and b_pad >= 16 and b_pad // tm < 2:
        b_pad = _round_up(b_pad, 16)             # give both TensorCores a tile
        tm = b_pad // 2

    # --- contraction (K) tiling ---
    if D <= 1024:
        d_pad, tk = D, D                         # single K step, full-extent
    else:
        d_pad = _round_up(D, 128)
        cands = [t for t in range(tk_pref, 127, -128) if d_pad % t == 0] or [128]
        tk = next((t for t in cands if footprint(tm, t, d_pad) <= budget),
                  cands[-1])

    # Last resort for extreme shapes: shrink the batch tile / accumulator.
    while footprint(tm, tk, d_pad) > budget and tm > 8:
        tm = max(8, (tm // 2) // 8 * 8)
        b_pad = _round_up(B, tm)

    vmem_limit = int(min(vmem_bytes,
                         max(int(footprint(tm, tk, d_pad) * 1.25) + (4 << 20),
                             16 << 20)))
    return b_pad, d_pad, tm, tk, vmem_limit


@jax.jit
def mlp_forward(x, w1, b1, w2, b2):
    B, D = x.shape
    assert w1.shape == (D, D), "hidden size equals input size in this module"
    out_dtype = x.dtype

    b_pad, d_pad, tm, tk, vmem_limit = _plan(B, D)

    # Zero-pad awkward shapes: padded hidden units see zero weights/bias, so
    # ReLU(0)=0 times zero w2 contributes nothing; padded rows are sliced off.
    if d_pad != D:
        x = jnp.pad(x, ((0, 0), (0, d_pad - D)))
        w1 = jnp.pad(w1, ((0, d_pad - D), (0, d_pad - D)))
        b1 = jnp.pad(b1, ((0, d_pad - D),))
        w2 = jnp.pad(w2, ((0, 0), (0, d_pad - D)))
    if b_pad != B:
        x = jnp.pad(x, ((0, b_pad - B), (0, 0)))

    # bf16 activations / weights for the MXU; accumulation & epilogue stay f32.
    x16 = x.astype(jnp.bfloat16)
    w116 = w1.astype(jnp.bfloat16)

    grid = (b_pad // tm, d_pad // tk)
    n_btiles = grid[0]
    cost = pl.CostEstimate(
        flops=2 * b_pad * d_pad * d_pad + 2 * b_pad * d_pad,
        transcendentals=0,
        bytes_accessed=(b_pad * d_pad * 2                 # x (bf16)
                        + n_btiles * d_pad * d_pad * 2    # W1 re-streamed / tile
                        + 2 * d_pad * 4 + b_pad * 4),     # b1, w2, out
    )

    # TODO(synk): for very large D, pre-pack W1 offline into contiguous
    #   (D//tk, D, tk) slabs so each W1 fetch is a single contiguous DMA.
    # TODO(synk): on v7x only, if a bundle dump shows the acc VMEM round-trip
    #   saturating vld/vst, switch the K loop to pltpu.matmul_push_rhs /
    #   matmul_acc_lhs / matmul_pop to accumulate in the MRB.
    out = pl.pallas_call(
        mlp_kernel,
        out_shape=jax.ShapeDtypeStruct((b_pad, 1), out_dtype),
        grid_spec=pltpu.PrefetchScalarGridSpec(
            num_scalar_prefetch=0,
            grid=grid,
            in_specs=[
                pl.BlockSpec((tm, tk), lambda i, k: (i, k)),        # x tile
                pl.BlockSpec((d_pad, tk), lambda i, k: (0, k)),     # W1 K-slab
                pl.BlockSpec((1, d_pad), lambda i, k: (0, 0)),      # b1 (f32)
                pl.BlockSpec((1, d_pad), lambda i, k: (0, 0)),      # W2 (f32)
                pl.BlockSpec(memory_space=pltpu.MemorySpace.SMEM),  # b2 scalar
            ],
            out_specs=pl.BlockSpec((tm, 1), lambda i, k: (i, 0)),
            scratch_shapes=[pltpu.VMEM((tm, d_pad), jnp.float32)],
        ),
        compiler_params=pltpu.CompilerParams(
            dimension_semantics=("parallel", "arbitrary"),
            vmem_limit_bytes=vmem_limit,
        ),
        cost_estimate=cost,
    )(x16, w116, b1.reshape(1, d_pad), w2.reshape(1, d_pad),
      b2.reshape(1, 1).astype(jnp.float32))

    return out[:B]


def init_params(key, input_size):
    # Mimic PyTorch nn.Linear default init: U(-1/sqrt(fan_in), 1/sqrt(fan_in))
    k1, k2, k3, k4 = jax.random.split(key, 4)
    bound = 1.0 / jnp.sqrt(input_size)
    w1 = jax.random.uniform(k1, (input_size, input_size), jnp.float32, -bound, bound)
    b1 = jax.random.uniform(k2, (input_size,), jnp.float32, -bound, bound)
    w2 = jax.random.uniform(k3, (1, input_size), jnp.float32, -bound, bound)
    b2 = jax.random.uniform(k4, (1,), jnp.float32, -bound, bound)
    return w1, b1, w2, b2


if __name__ == "__main__":
    key = jax.random.PRNGKey(0)
    batch, input_size = 8, 32
    kx, kp = jax.random.split(key)
    x = jax.random.normal(kx, (batch, input_size), dtype=jnp.float32)
    w1, b1, w2, b2 = init_params(kp, input_size)

    out = jax.block_until_ready(mlp_forward(x, w1, b1, w2, b2))

    # Reference with the same bf16 cast of x / W1 the kernel applies (matmul
    # accumulation and the whole epilogue are f32 in both).
    xb = x.astype(jnp.bfloat16).astype(jnp.float32)
    w1b = w1.astype(jnp.bfloat16).astype(jnp.float32)
    ref_bf16_in = jnp.maximum(xb @ w1b.T + b1, 0.0) @ w2.T + b2
    ref_f32 = jnp.maximum(x @ w1.T + b1, 0.0) @ w2.T + b2

    assert out.shape == (batch, 1)
    assert jnp.allclose(out, ref_bf16_in, atol=1e-4, rtol=1e-4)
    assert jnp.allclose(out, ref_f32, atol=5e-2, rtol=5e-2)

    print("KERNEL_OK")
</pallas_src>

<mosaic_0001>
module attributes {stable_mosaic.version = 11 : i64} {
  func.func @mlp_kernel(%arg0: i32, %arg1: i32, %arg2: memref<8x32xbf16, #tpu.memory_space<vmem>>, %arg3: memref<32x32xbf16, #tpu.memory_space<vmem>>, %arg4: memref<1x32xf32, #tpu.memory_space<vmem>>, %arg5: memref<1x32xf32, #tpu.memory_space<vmem>>, %arg6: memref<1x1xf32, #tpu.memory_space<smem>>, %arg7: memref<8x1xf32, #tpu.memory_space<vmem>>, %arg8: memref<8x32xf32, #tpu.memory_space<vmem>>) attributes {dimension_semantics = [#tpu.dimension_semantics<parallel>, #tpu.dimension_semantics<arbitrary>], iteration_bounds = array<i64: 1, 1>, scalar_prefetch = 0 : i64, scratch_operands = 1 : i64, tpu.core_type = #tpu.core_type<tc>, window_params = [{transform_indices = @transform_0, window_bounds = array<i64: 8, 32>}, {transform_indices = @transform_1, window_bounds = array<i64: 32, 32>}, {pipeline_mode = #tpu.pipeline_mode<synchronous>, transform_indices = @transform_2, window_bounds = array<i64: 1, 32>}, {pipeline_mode = #tpu.pipeline_mode<synchronous>, transform_indices = @transform_3, window_bounds = array<i64: 1, 32>}, {transform_indices = @transform_4, window_bounds = array<i64: 1, 1>}, {transform_indices = @transform_5, window_bounds = array<i64: 8, 1>}]} {
    %c0_i32 = arith.constant 0 : i32
    %0 = arith.cmpi eq, %arg1, %c0_i32 : i32
    %1 = arith.extui %0 : i1 to i32
    %c0_i32_0 = arith.constant 0 : i32
    %2 = arith.cmpi ne, %1, %c0_i32_0 : i32
    scf.if %2 {
      %cst_10 = arith.constant 0.000000e+00 : f32
      %12 = vector.broadcast %cst_10 : f32 to vector<8x32xf32>
      %c0_11 = arith.constant 0 : index
      %c0_12 = arith.constant 0 : index
      %13 = vector.load %arg8[%c0_11, %c0_12] : memref<8x32xf32, #tpu.memory_space<vmem>>, vector<8x32xf32>
      tpu.vector_store %arg8[%c0_11, %c0_12], %12 {strides = array<i32>} : memref<8x32xf32, #tpu.memory_space<vmem>>, vector<8x32xf32>,
    } else {
    }
    %c0 = arith.constant 0 : index
    %c0_1 = arith.constant 0 : index
    %3 = vector.load %arg8[%c0, %c0_1] : memref<8x32xf32, #tpu.memory_space<vmem>>, vector<8x32xf32>
    %c0_2 = arith.constant 0 : index
    %c0_3 = arith.constant 0 : index
    %4 = vector.load %arg2[%c0_2, %c0_3] : memref<8x32xbf16, #tpu.memory_space<vmem>>, vector<8x32xbf16>
    %c0_4 = arith.constant 0 : index
    %c0_5 = arith.constant 0 : index
    %5 = vector.load %arg3[%c0_4, %c0_5] : memref<32x32xbf16, #tpu.memory_space<vmem>>, vector<32x32xbf16>
    %cst = arith.constant dense<0.000000e+00> : vector<8x32xf32>
    %6 = tpu.matmul %4, %5, %cst {dimension_numbers = #tpu.dot_dimension_numbers<[1], [1], [0], [0], [0, 0, 1, 0], [], []>} : vector<8x32xbf16>, vector<32x32xbf16>, vector<8x32xf32> -> vector<8x32xf32>
    %7 = arith.addf %3, %6 : vector<8x32xf32>
    %c0_6 = arith.constant 0 : index
    %c0_7 = arith.constant 0 : index
    %8 = vector.load %arg8[%c0_6, %c0_7] : memref<8x32xf32, #tpu.memory_space<vmem>>, vector<8x32xf32>
    tpu.vector_store %arg8[%c0_6, %c0_7], %7 {strides = array<i32>} : memref<8x32xf32, #tpu.memory_space<vmem>>, vector<8x32xf32>,
    %c0_i32_8 = arith.constant 0 : i32
    %9 = arith.cmpi eq, %arg1, %c0_i32_8 : i32
    %10 = arith.extui %9 : i1 to i32
    %c0_i32_9 = arith.constant 0 : i32
    %11 = arith.cmpi ne, %10, %c0_i32_9 : i32
    scf.if %11 {
      %c0_10 = arith.constant 0 : index
      %c0_11 = arith.constant 0 : index
      %12 = vector.load %arg8[%c0_10, %c0_11] : memref<8x32xf32, #tpu.memory_space<vmem>>, vector<8x32xf32>
      %c0_12 = arith.constant 0 : index
      %c0_13 = arith.constant 0 : index
      %13 = vector.load %arg4[%c0_12, %c0_13] : memref<1x32xf32, #tpu.memory_space<vmem>>, vector<1x32xf32>
      %14 = vector.broadcast %13 : vector<1x32xf32> to vector<8x32xf32>
      %15 = arith.addf %12, %14 : vector<8x32xf32>
      %cst_14 = arith.constant 0.000000e+00 : f32
      %16 = vector.broadcast %cst_14 : f32 to vector<8x32xf32>
      %17 = arith.maximumf %15, %16 : vector<8x32xf32>
      %c0_15 = arith.constant 0 : index
      %c0_16 = arith.constant 0 : index
      %18 = vector.load %arg5[%c0_15, %c0_16] : memref<1x32xf32, #tpu.memory_space<vmem>>, vector<1x32xf32>
      %19 = vector.broadcast %18 : vector<1x32xf32> to vector<8x32xf32>
      %20 = arith.mulf %17, %19 : vector<8x32xf32>
      %cst_17 = arith.constant dense<0.000000e+00> : vector<8xf32>
      %21 = vector.multi_reduction <add>, %20, %cst_17 [1] : vector<8x32xf32> to vector<8xf32>
      %22 = vector.shape_cast %21 : vector<8xf32> to vector<8x1xf32>
      %c0_18 = arith.constant 0 : index
      %c0_19 = arith.constant 0 : index
      %23 = memref.load %arg6[%c0_18, %c0_19] : memref<1x1xf32, #tpu.memory_space<smem>>
      %24 = vector.broadcast %23 : f32 to vector<8x1xf32>
      %25 = arith.addf %22, %24 : vector<8x1xf32>
      %c0_20 = arith.constant 0 : index
      %c0_21 = arith.constant 0 : index
      %26 = vector.load %arg7[%c0_20, %c0_21] : memref<8x1xf32, #tpu.memory_space<vmem>>, vector<8x1xf32>
      tpu.vector_store %arg7[%c0_20, %c0_21], %25 {strides = array<i32>} : memref<8x1xf32, #tpu.memory_space<vmem>>, vector<8x1xf32>,
    } else {
    }
    return
  }
  func.func @transform_0(%arg0: i32, %arg1: i32) -> (i32, i32) {
    %c0_i32 = arith.constant 0 : i32
    return %arg0, %arg1 : i32, i32
  }
  func.func @transform_1(%arg0: i32, %arg1: i32) -> (i32, i32) {
    %c0_i32 = arith.constant 0 : i32
    %c0_i32_0 = arith.constant 0 : i32
    return %c0_i32, %arg1 : i32, i32
  }
  func.func @transform_2(%arg0: i32, %arg1: i32) -> (i32, i32) {
    %c0_i32 = arith.constant 0 : i32
    %c0_i32_0 = arith.constant 0 : i32
    %c0_i32_1 = arith.constant 0 : i32
    return %c0_i32, %c0_i32_0 : i32, i32
  }
  func.func @transform_3(%arg0: i32, %arg1: i32) -> (i32, i32) {
    %c0_i32 = arith.constant 0 : i32
    %c0_i32_0 = arith.constant 0 : i32
    %c0_i32_1 = arith.constant 0 : i32
    return %c0_i32, %c0_i32_0 : i32, i32
  }
  func.func @transform_4(%arg0: i32, %arg1: i32) -> (i32, i32) {
    %c0_i32 = arith.constant 0 : i32
    %c0_i32_0 = arith.constant 0 : i32
    %c0_i32_1 = arith.constant 0 : i32
    return %c0_i32, %c0_i32_0 : i32, i32
  }
  func.func @transform_5(%arg0: i32, %arg1: i32) -> (i32, i32) {
    %c0_i32 = arith.constant 0 : i32
    %c0_i32_0 = arith.constant 0 : i32
    return %arg0, %c0_i32 : i32, i32
  }
}

</mosaic_0001>

<llo_original>
// kernel: mlp_forward.1
$region0: #{mlp_forward.1}
  #allocation0 [shape = 'u32[]', space=smem, size = 0x4, offset = 0x4, fixed_abs, tag = 'smem constant byte address 0x4 - core index']
  #allocation1 [shape = 'u32[72,128]{1,0:T(1,128)}', space=vmem, size = 0x9000, scoped, tag = 'internal scratch']
  #allocation2 [shape = 'f32[8,32]{1,0:T(8,128)}', space=vmem, size = 0x1000, scoped, tag = 'scratch operand']
  #allocation3 [shape = 'f32[1,1]{1,0:T(1,128)S(6)}', space=smem, size = 0x200, scoped, tag = 'scoped memory for mlp_forward.1']
  %s0 = inlined_call_operand.vmem [shape: bf16[8,32], index: 0, kind: input, shape index: {}]
  %s1 = inlined_call_operand.vmem [shape: bf16[32,32], index: 1, kind: input, shape index: {}]
  %s2 = inlined_call_operand.vmem [shape: f32[1,32], index: 2, kind: input, shape index: {}]
  %s3 = inlined_call_operand.vmem [shape: f32[1,32], index: 3, kind: input, shape index: {}]
  %s4 = inlined_call_operand.<no memory space> [shape: f32[1,1], index: 4, kind: input, shape index: {}]
  %s5 = inlined_call_operand.vmem [shape: f32[8,1], index: 5, kind: output, shape index: {}]
  %s6 = sld [smem:[#allocation0]]
  $region38: #{mlp_forward.1} parent=0
    _
  %s8 = ssub.s32 1, %s6
  %s9 = scalar_select 0, %s8, %s6
  %10 = sst [smem:[#allocation3]] %s4
  // Predicated region
  $region2: #{mlp_forward.1} parent=0 // pred_check
    _
  $region3: #{mlp_forward.1} parent=0 // pred_check_branch
    %12 = sbr.rel (0) target = $region5
  $region4: #{mlp_forward.1} parent=0 // pred_region
    _
  $region5: #{mlp_forward.1} parent=0 // pred_fallthru
    _
  // Predicated region
  $region6: #{mlp_forward.1} parent=0 // pred_check
    _
  $region7: #{mlp_forward.1} parent=0 // pred_check_branch
    %14 = sbr.rel (0) target = $region9
  $region8: #{mlp_forward.1} parent=0 // pred_region
    _
  $region9: #{mlp_forward.1} parent=0 // pred_fallthru
    _
  // Predicated region
  $region10: #{mlp_forward.1} parent=0 // pred_check
    _
  $region11: #{mlp_forward.1} parent=0 // pred_check_branch
    %16 = sbr.rel (0) target = $region13
  $region12: #{mlp_forward.1} parent=0 // pred_region
    _
  $region13: #{mlp_forward.1} parent=0 // pred_fallthru
    _
  // Predicated region
  $region14: #{mlp_forward.1} parent=0 // pred_check
    _
  $region15: #{mlp_forward.1} parent=0 // pred_check_branch
    %18 = sbr.rel (0) target = $region17
  $region16: #{mlp_forward.1} parent=0 // pred_region
    _
  $region17: #{mlp_forward.1} parent=0 // pred_fallthru
    _
  // Predicated region
  $region18: #{mlp_forward.1} parent=0 // pred_check
    _
  $region19: #{mlp_forward.1} parent=0 // pred_check_branch
    %20 = sbr.rel (0) target = $region21
  $region20: #{mlp_forward.1} parent=0 // pred_region
    _
  $region21: #{mlp_forward.1} parent=0 // pred_fallthru
    _
  %p22 = scmp.eq.s32.totalorder 0, 0
  // Predicated region
  $region22: #{mlp_forward.1} parent=0 // pred_check
    %p23 = pneg %p22
  $region23: #{mlp_forward.1} parent=0 // pred_check_branch
    %25 = sbr.rel (%p23) target = $region25
  $region24: #{mlp_forward.1} parent=0 // pred_region
    %vm26 = vcmask 261120
    %27 = vst.msk [vmem:[#allocation2] sm:$0xff] %vm26, 0.0
  $region25: #{mlp_forward.1} parent=0 // pred_fallthru
    _
  %v28 = vld [vmem:[#allocation2] sm:$0xff]
  %v29 = vld [vmem:[%s0] sm:$0xf]
  %v30 = vld [vmem:[%s1] sm:$0xf]
  %v31 = vld [vmem:[%s1 + $0x4] sm:$0xf]
  %v32 = vld [vmem:[%s1 + $0x8] sm:$0xf]
  %v33 = vld [vmem:[%s1 + $0xc] sm:$0xf]
  %v38 = vunpack.c.l.b16 %v30
  %v39 = vunpack.c.l.b16 %v31
  %v40 = vunpack.c.l.b16 %v32
  %v41 = vunpack.c.l.b16 %v33
  %v42 = vpack.c.b16 %v39, %v38
  %v43 = vpack.c.b16 %v41, %v40
  %vm44 = vcmask 261120
  %v46 = vsel %vm44, %v29, 0
  %v49 = vsel %vm44, %v42, 0
  %v52 = vsel %vm44, %v43, 0
  %54 = vmatpush.bf16.xpose.msra.mxu0 0
  %55 = vmatpush.bf16.xpose.msra.mxu0 0
  %56 = vmatpush.bf16.xpose.msra.mxu0 0
  %57 = vmatpush.bf16.xpose.msra.mxu0 0
  %58 = vmatpush.bf16.xpose.msra.mxu0 0
  %59 = vmatpush.bf16.xpose.msra.mxu0 0
  %60 = vmatpush.bf16.xpose.msra.mxu0 %v52
  %61 = vmatpush.bf16.xpose.msra.mxu0 %v49
  %62 = vmatmul.bf16.gmra.mxu0 %v46
  %v63 = vpop.f32.mrf.mxu0
  %v64 = vadd.f32 0.0, %v63
  %v65 = vpop.f32.mrf.mxu0
  %66 = vdwg.mxu0
  %v67 = vadd.f32 %v28, %v64
  %68 = vst.msk [vmem:[#allocation2] sm:$0xff] %vm44, %v67
  // Predicated region
  $region26: #{mlp_forward.1} parent=0 // pred_check
    %p69 = pneg %p22
  $region27: #{mlp_forward.1} parent=0 // pred_check_branch
    %71 = sbr.rel (%p69) target = $region29
  $region28: #{mlp_forward.1} parent=0 // pred_region
    %v72 = vld [vmem:[#allocation2] sm:$0xff]
    %v73 = vld [vmem:[%s2] sm:$0x1]
    %v75 = vperm.slane %v73, 0
    %v77 = vadd.f32 %v72, %v75
    %v78 = vmax.f32 %v77, 0.0
    %v79 = vld [vmem:[%s3] sm:$0x1]
    %v81 = vperm.slane %v79, 0
    %v83 = vmul.f32 %v78, %v81
    %v84 = vsel %vm44, %v83, 0.0
    %85 = vadd.xlane.f32.xlu0 %v84
    %v86 = vpop.xlane.xlu0 %85
    %s87 = sld [smem:[#allocation3]]
    %v88 = vstv %s87
    %v89 = vadd.f32 %v86, %v88
    %vm90 = vcmask 7168
    %91 = vst.msk [vmem:[%s5] sm:$0xff] %vm90, %v89
  $region29: #{mlp_forward.1} parent=0 // pred_fallthru
    _
  // Predicated region
  $region30: #{mlp_forward.1} parent=0 // pred_check
    _
  $region31: #{mlp_forward.1} parent=0 // pred_check_branch
    %93 = sbr.rel (0) target = $region33
  $region32: #{mlp_forward.1} parent=0 // pred_region
    _
  $region33: #{mlp_forward.1} parent=0 // pred_fallthru
    _
  // Predicated region
  $region34: #{mlp_forward.1} parent=0 // pred_check
    _
  $region35: #{mlp_forward.1} parent=0 // pred_check_branch
    %95 = sbr.rel (0) target = $region37
  $region36: #{mlp_forward.1} parent=0 // pred_region
    _
  $region37: #{mlp_forward.1} parent=0 // pred_fallthru
    _

</llo_original>
